<compile_context>
chip_gen: v7x
topology: tpu7x:2x2x1
jax: 0.10.0
libtpu: 0.0.40
codegen_flags: <defaults>
</compile_context>

<pallas_src>
import functools

import jax
import jax.numpy as jnp
from jax.experimental import pallas as pl
from jax.experimental.pallas import tpu as pltpu


def _identity_kernel(x_ref, o_ref):
    # Elementwise pass-through of the current VMEM tile (VPU copy).
    o_ref[...] = x_ref[...]


@functools.partial(jax.jit, static_argnames=("lane_width", "target_tile_rows"))
def base_model_forward(x, *, lane_width=1024, target_tile_rows=1024):
    """Identity forward of BaseModel, run through a Pallas TPU kernel.

    x: any shape (the reference module never constrains it).  Returns an
    array of identical shape/dtype.
    """
    orig_shape = x.shape
    n = x.size
    itemsize = jnp.dtype(x.dtype).itemsize

    # Lane-dense last dim: large multiple of 128 (perf review: biggest lever
    # for a mem-bound copy is unmasked, full-vreg stores).
    lanes = lane_width  # 1024 = 8 x 128

    # Dtype-aware sublane packing: 8 rows f32, 16 bf16, 32 int8/fp8.
    pack = max(8, 32 // max(itemsize, 1))

    # Rows needed to hold all elements at `lanes` per row.
    rows_needed = pl.cdiv(n, lanes)

    # Row tile: as large as the target, multiple of `pack`, capped so one
    # block stays ~4 MiB (x4 for double-buffered in+out => ~16 MiB VMEM,
    # safe on v7x's 64 MiB VMEM and within the raised scoped limit below).
    tile_budget_bytes = 4 * 1024 * 1024
    max_tr_vmem = max(pack, (tile_budget_bytes // (lanes * itemsize)) // pack * pack)
    tr = min(target_tile_rows, max_tr_vmem)
    tr = max(pack, min(tr, ((rows_needed + pack - 1) // pack) * pack))

    # Pad rows to a multiple of the tile (no tr//=1 performance cliff).
    rows = ((rows_needed + tr - 1) // tr) * tr
    padded = rows * lanes

    flat = x.reshape(-1)
    if padded != n:
        flat = jnp.pad(flat, (0, padded - n))
    x2d = flat.reshape(rows, lanes)

    out2d = pl.pallas_call(
        _identity_kernel,
        out_shape=jax.ShapeDtypeStruct((rows, lanes), x.dtype),
        grid_spec=pltpu.PrefetchScalarGridSpec(
            num_scalar_prefetch=0,
            grid=(rows // tr,),
            in_specs=[pl.BlockSpec((tr, lanes), lambda i: (i, 0))],
            out_specs=pl.BlockSpec((tr, lanes), lambda i: (i, 0)),
        ),
        # Identity: let the output share the input buffer (removes one full
        # HBM round trip when XLA can donate the intermediate).
        input_output_aliases={0: 0},
        compiler_params=pltpu.CompilerParams(
            dimension_semantics=("parallel",),  # v7x: shard grid over 2 TCs
            vmem_limit_bytes=64 << 20,          # v5e default scoped VMEM is ~16 MiB
        ),
    )(x2d)

    return out2d.reshape(-1)[:n].reshape(orig_shape)


class BaseModelPallas:
    """JAX/Pallas analogue of BaseModel: no parameters, identity-style forward."""

    def __init__(self):
        # BaseModel defines no nn.Parameters.
        self.params = {}

    @property
    def trainable_params(self):
        return [p for p in jax.tree_util.tree_leaves(self.params)]

    def __str__(self):
        n = sum(int(jnp.size(p)) for p in self.trainable_params)
        return "BaseModelPallas()\nTrainable parameters: {}".format(n)

    def __call__(self, x):
        return base_model_forward(x)


if __name__ == "__main__":
    key = jax.random.PRNGKey(0)
    x = jax.random.normal(key, (2, 4, 16, 16), dtype=jnp.float32)

    model = BaseModelPallas()
    y = model(x)
    y = jax.block_until_ready(y)

    assert y.shape == x.shape and y.dtype == x.dtype
    assert bool(jnp.all(y == x))
    # Mirrors BaseModel.__str__ param count (0 trainable params).
    _ = str(model)

    print("KERNEL_OK")
</pallas_src>

<mosaic_0001>
module attributes {stable_mosaic.version = 11 : i64} {
  func.func @_identity_kernel(%arg0: i32, %arg1: memref<8x1024xf32, #tpu.memory_space<vmem>>, %arg2: memref<8x1024xf32, #tpu.memory_space<vmem>>) attributes {dimension_semantics = [#tpu.dimension_semantics<parallel>], iteration_bounds = array<i64: 1>, scalar_prefetch = 0 : i64, scratch_operands = 0 : i64, tpu.core_type = #tpu.core_type<tc>, window_params = [{transform_indices = @transform_0, window_bounds = array<i64: 8, 1024>}, {transform_indices = @transform_1, window_bounds = array<i64: 8, 1024>}]} {
    %c0 = arith.constant 0 : index
    %c0_0 = arith.constant 0 : index
    %0 = vector.load %arg1[%c0, %c0_0] : memref<8x1024xf32, #tpu.memory_space<vmem>>, vector<8x1024xf32>
    %c0_1 = arith.constant 0 : index
    %c0_2 = arith.constant 0 : index
    %1 = vector.load %arg2[%c0_1, %c0_2] : memref<8x1024xf32, #tpu.memory_space<vmem>>, vector<8x1024xf32>
    tpu.vector_store %arg2[%c0_1, %c0_2], %0 {strides = array<i32>} : memref<8x1024xf32, #tpu.memory_space<vmem>>, vector<8x1024xf32>,
    return
  }
  func.func @transform_0(%arg0: i32) -> (i32, i32) {
    %c0_i32 = arith.constant 0 : i32
    %c0_i32_0 = arith.constant 0 : i32
    return %arg0, %c0_i32 : i32, i32
  }
  func.func @transform_1(%arg0: i32) -> (i32, i32) {
    %c0_i32 = arith.constant 0 : i32
    %c0_i32_0 = arith.constant 0 : i32
    return %arg0, %c0_i32 : i32, i32
  }
}

</mosaic_0001>

<llo_original>
// kernel: base_model_forward.1
$region0: #{base_model_forward.1}
  #allocation0 [shape = 'u32[]', space=smem, size = 0x4, offset = 0x4, fixed_abs, tag = 'smem constant byte address 0x4 - core index']
  #allocation1 [shape = 'u32[144,128]{1,0:T(1,128)}', space=vmem, size = 0x12000, scoped, tag = 'internal scratch']
  %s0 = inlined_call_operand.hbm [shape: f32[8,1024], index: 0, kind: input, shape index: {}, may-alias: {0,1}]
  %s1 = inlined_call_operand.hbm [shape: f32[8,1024], index: 1, kind: output, shape index: {}, may-alias: {0,1}]
  %s2 = sld [smem:[#allocation0]]
  $region18: #{base_model_forward.1} parent=0
    _
  %s4 = ssub.s32 1, %s2
  %s5 = scalar_select 0, %s4, %s2
  $region1: #{base_model_forward.1} parent=0
    #allocation2 [shape = 'u8[32768]{0}', space=vmem, size = 0x8000, scoped, tag = 'input window, operand 0, single buffered']
    #allocation3 [shape = 's32[1]{0}', space=sflag, size = 0x4, scoped, tag = 'scoped memory for base_model_forward.1']
    #allocation4 [shape = 's32[1]{0}', space=sflag, size = 0x4, scoped, tag = 'scoped memory for base_model_forward.1']
    #allocation5 [shape = 'u8[32768]{0}', space=vmem, size = 0x8000, scoped, tag = 'output window, operand 0, single buffered']
    %6 = vsyncpa [#allocation3], 0
    %7 = vsyncpa [#allocation4], 0
    // Predicated region
    $region2: #{base_model_forward.1} parent=1 // pred_check
      _
    $region3: #{base_model_forward.1} parent=1 // pred_check_branch
      %9 = sbr.rel (0) target = $region5
    $region4: #{base_model_forward.1} parent=1 // pred_region
      %s11 = ssub.s32 1024, 1024
      %12 = vsyncadd [#allocation3], %s11
      %s14 = sshll.u32 [#allocation2], 4
      %s15 = int_to_ptr.vmem [resolvable:$true] %s14
      %17 = dma.hbm_to_vmem [thread:$0]  %s0, 1024, %s15, [#allocation3]
    $region5: #{base_model_forward.1} parent=1 // pred_fallthru
      _
    // Predicated region
    $region6: #{base_model_forward.1} parent=1 // pred_check
      _
    $region7: #{base_model_forward.1} parent=1 // pred_check_branch
      %19 = sbr.rel (0) target = $region9
    $region8: #{base_model_forward.1} parent=1 // pred_region
      %20 = dma.done [#allocation3], 1024
    $region9: #{base_model_forward.1} parent=1 // pred_fallthru
      _
    %v21 = vld [vmem:[#allocation2] sm:$0xff]
    %v22 = vld [vmem:[#allocation2 + $0x8] sm:$0xff]
    %v23 = vld [vmem:[#allocation2 + $0x10] sm:$0xff]
    %v24 = vld [vmem:[#allocation2 + $0x18] sm:$0xff]
    %v25 = vld [vmem:[#allocation2 + $0x20] sm:$0xff]
    %v26 = vld [vmem:[#allocation2 + $0x28] sm:$0xff]
    %v27 = vld [vmem:[#allocation2 + $0x30] sm:$0xff]
    %v28 = vld [vmem:[#allocation2 + $0x38] sm:$0xff]
    %29 = vst [vmem:[#allocation5] sm:$0xff] %v21
    %30 = vst [vmem:[#allocation5 + $0x8] sm:$0xff] %v22
    %31 = vst [vmem:[#allocation5 + $0x10] sm:$0xff] %v23
    %32 = vst [vmem:[#allocation5 + $0x18] sm:$0xff] %v24
    %33 = vst [vmem:[#allocation5 + $0x20] sm:$0xff] %v25
    %34 = vst [vmem:[#allocation5 + $0x28] sm:$0xff] %v26
    %35 = vst [vmem:[#allocation5 + $0x30] sm:$0xff] %v27
    %36 = vst [vmem:[#allocation5 + $0x38] sm:$0xff] %v28
    // Predicated region
    $region10: #{base_model_forward.1} parent=1 // pred_check
      _
    $region11: #{base_model_forward.1} parent=1 // pred_check_branch
      %38 = sbr.rel (0) target = $region13
    $region12: #{base_model_forward.1} parent=1 // pred_region
      %s40 = ssub.s32 1024, 1024
      %41 = vsyncadd [#allocation4], %s40
      %s43 = sshll.u32 [#allocation5], 4
      %s44 = int_to_ptr.vmem [resolvable:$true] %s43
      %46 = dma.vmem_to_hbm [thread:$0]  %s44, 1024, %s1, [#allocation4]
    $region13: #{base_model_forward.1} parent=1 // pred_fallthru
      _
    // Predicated region
    $region14: #{base_model_forward.1} parent=1 // pred_check
      _
    $region15: #{base_model_forward.1} parent=1 // pred_check_branch
      %48 = sbr.rel (0) target = $region17
    $region16: #{base_model_forward.1} parent=1 // pred_region
      %49 = dma.done [#allocation4], 1024
    $region17: #{base_model_forward.1} parent=1 // pred_fallthru
      _
    %50 = vsyncpa [#allocation3], 1
    %51 = vsyncpa [#allocation4], 1

</llo_original>
